<compile_context>
chip_gen: v5e
topology: v5e:2x2
jax: 0.10.0
libtpu: 0.0.40
codegen_flags: <defaults>
</compile_context>

<pallas_src>
import jax
import jax.numpy as jnp
from jax.experimental import pallas as pl
from jax.experimental.pallas import tpu as pltpu

_LANES = 128


def _sublane_pack(dtype):
    itemsize = jnp.dtype(dtype).itemsize
    packs = {4: 8, 2: 16, 1: 32}
    if jnp.issubdtype(jnp.dtype(dtype), jnp.complexfloating) or itemsize not in packs:
        raise ValueError(
            f"linear_combination: unsupported dtype {dtype}; use a 1/2/4-byte real dtype."
        )
    return packs[itemsize]


def _round_up(x, m):
    return ((x + m - 1) // m) * m


def _chip_budgets():
    """Returns (double-buffered tile budget, scoped vmem limit, multi-TensorCore chip?)."""
    try:
        vmem_cap = int(pltpu.get_tpu_info().vmem_capacity_bytes)
    except Exception:
        vmem_cap = None
    if vmem_cap is not None and vmem_cap >= 100 * (1 << 20):
        # v5e / v6e: 128 MiB physical VMEM, single TensorCore per chip.
        return 48 * (1 << 20), 64 * (1 << 20), False
    # v7x (64 MiB VMEM, 2 TCs/chip) or unknown chip: conservative budget.
    return 32 * (1 << 20), 48 * (1 << 20), True


def _make_kernel(k):
    def kernel(params_ref, *refs):
        # params_ref: SMEM (K,) float32 scalars
        # refs[:k]:   VMEM (TR, 128) tiles of each input (input dtype through the
        #             DMA; upcast to f32 only here)
        # refs[k]:    VMEM (TR, 128) output tile
        hs_refs = refs[:k]
        o_ref = refs[k]
        acc = params_ref[0] * hs_refs[0][...].astype(jnp.float32)
        for i in range(1, k):  # K is static -> fully unrolled VPU weighted sum
            acc = acc + params_ref[i] * hs_refs[i][...].astype(jnp.float32)
        o_ref[...] = acc.astype(o_ref.dtype)

    return kernel


def linear_combination(params, hs, *, tile_rows=8192):
    """params: (K,) float32.  hs: sequence of K equal-shape arrays.  Returns sum_i params[i]*hs[i]."""
    hs = list(hs)
    k = len(hs)
    if k == 0:
        raise ValueError("linear_combination: need at least one input tensor")
    out_shape = hs[0].shape
    dtype = hs[0].dtype
    itemsize = jnp.dtype(dtype).itemsize
    sublane = _sublane_pack(dtype)
    params_f32 = params.astype(jnp.float32)

    total = 1
    for d in out_shape:
        total *= d
    rows = total // _LANES          # full 128-lane rows handled by the kernel
    tail = total - rows * _LANES    # <128 trailing elements handled in plain jnp

    flats = [h.reshape(total) for h in hs]

    def _jnp_combine(parts):
        acc = params_f32[0] * parts[0].astype(jnp.float32)
        for i in range(1, k):
            acc = acc + params_f32[i] * parts[i].astype(jnp.float32)
        return acc.astype(dtype)

    if rows == 0:
        # Problem is smaller than a single lane row: not worth a kernel launch.
        return _jnp_combine(flats).reshape(out_shape)

    main_elems = rows * _LANES
    if tail:
        mains = [f[:main_elems].reshape(rows, _LANES) for f in flats]
    else:
        mains = [f.reshape(rows, _LANES) for f in flats]   # zero-copy reshape

    # --- generation-aware tile sizing (HBM-bandwidth-bound op) --------------
    tile_budget, vmem_limit, multi_core = _chip_budgets()
    bytes_per_row = _LANES * itemsize * (k + 1)            # K inputs + 1 output
    max_tile = max(sublane, (tile_budget // (2 * bytes_per_row)) // sublane * sublane)
    cap = max(sublane, min(tile_rows, max_tile) // sublane * sublane)

    if rows <= cap:
        if multi_core and rows >= 2 * sublane:
            # Split into 2 roughly-equal steps so the "parallel" axis can use
            # both v7x TensorCores.
            tile = _round_up(pl.cdiv(rows, 2), sublane)
        else:
            # Single-TC chip (v5e/v6e): one full-extent block, no extra step.
            tile = rows
    else:
        tile = cap
        if multi_core:
            steps = pl.cdiv(rows, tile)
            if steps % 2 == 1:
                # Best-effort: shrink the tile slightly so the 2 TCs get an
                # even number of steps (balanced work).
                alt = max(sublane, _round_up(pl.cdiv(rows, steps + 1), sublane))
                if pl.cdiv(rows, alt) % 2 == 0:
                    tile = alt

    grid = (pl.cdiv(rows, tile),)

    kernel = _make_kernel(k)

    in_specs = [pl.BlockSpec(memory_space=pltpu.MemorySpace.SMEM)]  # (K,) scalars
    in_specs += [pl.BlockSpec((tile, _LANES), lambda r: (r, 0)) for _ in range(k)]

    cost = pl.CostEstimate(
        flops=2 * k * main_elems,
        transcendentals=0,
        bytes_accessed=(k + 1) * main_elems * itemsize,
    )

    out_main = pl.pallas_call(
        kernel,
        out_shape=jax.ShapeDtypeStruct((rows, _LANES), dtype),
        grid_spec=pltpu.PrefetchScalarGridSpec(
            num_scalar_prefetch=0,
            grid=grid,
            in_specs=in_specs,
            out_specs=pl.BlockSpec((tile, _LANES), lambda r: (r, 0)),
        ),
        compiler_params=pltpu.CompilerParams(
            dimension_semantics=("parallel",),
            vmem_limit_bytes=vmem_limit,
        ),
        cost_estimate=cost,
    )(params_f32, *mains)

    if tail:
        # <128-element tail: tiny jnp expression instead of padding every input.
        tail_out = _jnp_combine([f[main_elems:] for f in flats])
        return jnp.concatenate([out_main.reshape(main_elems), tail_out]).reshape(out_shape)
    return out_main.reshape(out_shape)


if __name__ == "__main__":
    key = jax.random.PRNGKey(0)

    filter_order = 3      # K
    B, C, H, W = 2, 4, 16, 16

    k_params, k_hs = jax.random.split(key)
    # One scalar per filter order (torch.randn(1) each in the PyTorch module).
    params = jax.random.normal(k_params, (filter_order,), dtype=jnp.float32)
    # hs: list of filter_order tensors, each (B, C, H, W) NCHW.
    hs_all = jax.random.normal(k_hs, (filter_order, B, C, H, W), dtype=jnp.float32)
    hs = [hs_all[i] for i in range(filter_order)]

    out = linear_combination(params, hs)
    out = jax.block_until_ready(out)

    # Reference check in plain JAX (same math as the PyTorch forward).
    ref = jnp.zeros((B, C, H, W), jnp.float32)
    for i in range(filter_order):
        ref = ref + params[i] * hs[i]
    assert out.shape == (B, C, H, W)
    assert out.dtype == ref.dtype
    assert jnp.allclose(out, ref, atol=1e-5, rtol=1e-5)

    print("KERNEL_OK")
</pallas_src>

<mosaic_0001>
module attributes {stable_mosaic.version = 11 : i64} {
  func.func @kernel(%arg0: i32, %arg1: memref<3xf32, #tpu.memory_space<smem>>, %arg2: memref<8x128xf32, #tpu.memory_space<vmem>>, %arg3: memref<8x128xf32, #tpu.memory_space<vmem>>, %arg4: memref<8x128xf32, #tpu.memory_space<vmem>>, %arg5: memref<8x128xf32, #tpu.memory_space<vmem>>) attributes {dimension_semantics = [#tpu.dimension_semantics<parallel>], iteration_bounds = array<i64: 2>, scalar_prefetch = 0 : i64, scratch_operands = 0 : i64, tpu.core_type = #tpu.core_type<tc>, window_params = [{transform_indices = @transform_0, window_bounds = array<i64: 3>}, {transform_indices = @transform_1, window_bounds = array<i64: 8, 128>}, {transform_indices = @transform_2, window_bounds = array<i64: 8, 128>}, {transform_indices = @transform_3, window_bounds = array<i64: 8, 128>}, {transform_indices = @transform_4, window_bounds = array<i64: 8, 128>}]} {
    %c0 = arith.constant 0 : index
    %0 = memref.load %arg1[%c0] : memref<3xf32, #tpu.memory_space<smem>>
    %c0_0 = arith.constant 0 : index
    %c0_1 = arith.constant 0 : index
    %1 = vector.load %arg2[%c0_0, %c0_1] : memref<8x128xf32, #tpu.memory_space<vmem>>, vector<8x128xf32>
    %2 = vector.broadcast %0 : f32 to vector<8x128xf32>
    %3 = arith.mulf %2, %1 : vector<8x128xf32>
    %c1 = arith.constant 1 : index
    %4 = memref.load %arg1[%c1] : memref<3xf32, #tpu.memory_space<smem>>
    %c0_2 = arith.constant 0 : index
    %c0_3 = arith.constant 0 : index
    %5 = vector.load %arg3[%c0_2, %c0_3] : memref<8x128xf32, #tpu.memory_space<vmem>>, vector<8x128xf32>
    %6 = vector.broadcast %4 : f32 to vector<8x128xf32>
    %7 = arith.mulf %6, %5 : vector<8x128xf32>
    %8 = arith.addf %3, %7 : vector<8x128xf32>
    %c2 = arith.constant 2 : index
    %9 = memref.load %arg1[%c2] : memref<3xf32, #tpu.memory_space<smem>>
    %c0_4 = arith.constant 0 : index
    %c0_5 = arith.constant 0 : index
    %10 = vector.load %arg4[%c0_4, %c0_5] : memref<8x128xf32, #tpu.memory_space<vmem>>, vector<8x128xf32>
    %11 = vector.broadcast %9 : f32 to vector<8x128xf32>
    %12 = arith.mulf %11, %10 : vector<8x128xf32>
    %13 = arith.addf %8, %12 : vector<8x128xf32>
    %c0_6 = arith.constant 0 : index
    %c0_7 = arith.constant 0 : index
    %14 = vector.load %arg5[%c0_6, %c0_7] : memref<8x128xf32, #tpu.memory_space<vmem>>, vector<8x128xf32>
    tpu.vector_store %arg5[%c0_6, %c0_7], %13 {strides = array<i32>} : memref<8x128xf32, #tpu.memory_space<vmem>>, vector<8x128xf32>,
    return
  }
  func.func @transform_0(%arg0: i32) -> i32 {
    %c0_i32 = arith.constant 0 : i32
    %c0_i32_0 = arith.constant 0 : i32
    return %c0_i32 : i32
  }
  func.func @transform_1(%arg0: i32) -> (i32, i32) {
    %c0_i32 = arith.constant 0 : i32
    %c0_i32_0 = arith.constant 0 : i32
    return %arg0, %c0_i32 : i32, i32
  }
  func.func @transform_2(%arg0: i32) -> (i32, i32) {
    %c0_i32 = arith.constant 0 : i32
    %c0_i32_0 = arith.constant 0 : i32
    return %arg0, %c0_i32 : i32, i32
  }
  func.func @transform_3(%arg0: i32) -> (i32, i32) {
    %c0_i32 = arith.constant 0 : i32
    %c0_i32_0 = arith.constant 0 : i32
    return %arg0, %c0_i32 : i32, i32
  }
  func.func @transform_4(%arg0: i32) -> (i32, i32) {
    %c0_i32 = arith.constant 0 : i32
    %c0_i32_0 = arith.constant 0 : i32
    return %arg0, %c0_i32 : i32, i32
  }
}

</mosaic_0001>

<llo_original>
// kernel: tpu_custom_call.1
$region0: #{tpu_custom_call.1}
  #allocation0 [shape = 'u32[]', space=smem, size = 0x4, offset = 0x4, fixed_abs, tag = 'smem constant byte address 0x4 - core index']
  #allocation1 [shape = 'u32[72,128]{1,0:T(1,128)}', space=vmem, size = 0x9000, scoped, tag = 'internal scratch']
  %s0 = inlined_call_operand.hbm [shape: f32[3], index: 0, kind: input, shape index: {}]
  %s1 = inlined_call_operand.hbm [shape: f32[16,128], index: 1, kind: input, shape index: {}]
  %s2 = inlined_call_operand.hbm [shape: f32[16,128], index: 2, kind: input, shape index: {}]
  %s3 = inlined_call_operand.hbm [shape: f32[16,128], index: 3, kind: input, shape index: {}]
  %s4 = inlined_call_operand.hbm [shape: f32[16,128], index: 4, kind: output, shape index: {}]
  %s5 = sld [smem:[#allocation0]]
  $region65: #{tpu_custom_call.1} parent=0
    _
  %s7 = ssub.s32 1, %s5
  %s8 = scalar_select 0, %s7, %s5
  $region1: #{tpu_custom_call.1} parent=0
    #allocation2 [shape = 'u8[512]{0}', space=smem, size = 0x200, scoped, tag = 'input window, operand 0, single buffered']
    #allocation3 [shape = 's32[2]{0}', space=sflag, size = 0x8, scoped, tag = 'scoped memory for tpu_custom_call.1']
    #allocation4 [shape = 's32[2]{0}', space=sflag, size = 0x8, scoped, tag = 'scoped memory for tpu_custom_call.1']
    #allocation5 [shape = 's32[2]{0}', space=sflag, size = 0x8, scoped, tag = 'scoped memory for tpu_custom_call.1']
    #allocation6 [shape = 'u8[8192]{0}', space=vmem, size = 0x2000, scoped, tag = 'input window, operand 1']
    #allocation7 [shape = 'u8[8192]{0}', space=vmem, size = 0x2000, scoped, tag = 'input window, operand 2']
    #allocation8 [shape = 's32[2]{0}', space=sflag, size = 0x8, scoped, tag = 'scoped memory for tpu_custom_call.1']
    #allocation9 [shape = 'u8[8192]{0}', space=vmem, size = 0x2000, scoped, tag = 'input window, operand 3']
    #allocation10 [shape = 'u8[8192]{0}', space=vmem, size = 0x2000, scoped, tag = 'output window, operand 0']
    %9 = vsyncpa [#allocation5], 0
    %10 = vsyncpa [#allocation3], 0
    %s11 = scalar_lea.sflag [#allocation3], 1
    %12 = vsyncpa %s11, 0
    %13 = vsyncpa [#allocation8], 0
    %s14 = scalar_lea.sflag [#allocation8], 1
    %15 = vsyncpa %s14, 0
    %16 = vsyncpa [#allocation4], 0
    %s17 = scalar_lea.sflag [#allocation4], 1
    %18 = vsyncpa %s17, 0
    loop: start=0, step=1, limit=4
    $region2: #{tpu_custom_call.1} parent=1 // loop_pre_header
      _
    $region3: #{tpu_custom_call.1} parent=1 // loop_header
      %s20 = sphi 0, %s24
      %p21 = scmp.ge.s32.totalorder %s20, 4
      %s28 = sphi 0, %s28
      %s30 = sphi 0, %s28
      %s31 = sphi 0, %s30
      %s45 = sphi 0, %s31
      %s51 = sphi 0, %s53
      %s54 = sphi 0, %s51
      %s55 = sphi 0, %s54
      %s71 = sphi 0, %s55
      %s77 = sphi 0, %s79
      %s80 = sphi 0, %s77
      %s81 = sphi 0, %s80
      %s97 = sphi 0, %s81
      %s103 = sphi 0, %s105
      %s106 = sphi 0, %s103
      %s107 = sphi 0, %s106
      %s123 = sphi 0, %s107
      %s129 = sphi 0, %s131
      %s132 = sphi 0, %s129
      %s133 = sphi 0, %s132
      %s149 = sphi 0, %s133
    $region4: #{tpu_custom_call.1} parent=1 // loop_header_branch
      %23 = sbr.rel (%p21) target = $region8
    $region5: #{tpu_custom_call.1} parent=1 // loop_body
      %s25 = ssub.s32 %s20, 1
      %s26 = ssub.s32 %s20, 2
      %s27 = sadd.s32 %s20, 1
      %s29 = sadd.s32 %s28, 1
      %p32 = scmp.eq.s32.totalorder %s20, 1
      %p33 = scmp.ne.s32.totalorder %s28, %s30
      %p34 = scmp.eq.s32.totalorder %s20, 0
      %p35 = por %p33, %p34
      %p36 = scmp.ne.s32.totalorder %s28, %s30
      %p37 = scmp.eq.s32.totalorder %s25, 1
      %p38 = por %p36, %p37
      %p39 = scmp.ne.s32.totalorder %s30, %s31
      %p40 = scmp.eq.s32.totalorder %s25, 0
      %p41 = por %p39, %p40
      %p42 = scmp.ne.s32.totalorder %s30, %s31
      %p43 = scmp.eq.s32.totalorder %s26, 1
      %p44 = por %p42, %p43
      %p46 = scmp.ne.s32.totalorder %s31, %s45
      %p47 = scmp.eq.s32.totalorder %s26, 0
      %p48 = por %p46, %p47
      %s49 = ssub.s32 %s20, %s27
      %p50 = scmp.eq.s32.totalorder %s49, 0
      %s52 = sadd.s32 %s51, 1
      %s53 = scalar_select %p50, %s51, %s52
      %p56 = pneg %p50
      %p57 = scmp.eq.s32.totalorder %s20, 1
      %p58 = por %p56, %p57
      %p59 = scmp.ne.s32.totalorder %s51, %s54
      %p60 = scmp.eq.s32.totalorder %s20, 0
      %p61 = por %p59, %p60
      %p62 = scmp.ne.s32.totalorder %s51, %s54
      %p63 = scmp.eq.s32.totalorder %s25, 1
      %p64 = por %p62, %p63
      %p65 = scmp.ne.s32.totalorder %s54, %s55
      %p66 = scmp.eq.s32.totalorder %s25, 0
      %p67 = por %p65, %p66
      %p68 = scmp.ne.s32.totalorder %s54, %s55
      %p69 = scmp.eq.s32.totalorder %s26, 1
      %p70 = por %p68, %p69
      %p72 = scmp.ne.s32.totalorder %s55, %s71
      %p73 = scmp.eq.s32.totalorder %s26, 0
      %p74 = por %p72, %p73
      %s75 = ssub.s32 %s20, %s27
      %p76 = scmp.eq.s32.totalorder %s75, 0
      %s78 = sadd.s32 %s77, 1
      %s79 = scalar_select %p76, %s77, %s78
      %p82 = pneg %p76
      %p83 = scmp.eq.s32.totalorder %s20, 1
      %p84 = por %p82, %p83
      %p85 = scmp.ne.s32.totalorder %s77, %s80
      %p86 = scmp.eq.s32.totalorder %s20, 0
      %p87 = por %p85, %p86
      %p88 = scmp.ne.s32.totalorder %s77, %s80
      %p89 = scmp.eq.s32.totalorder %s25, 1
      %p90 = por %p88, %p89
      %p91 = scmp.ne.s32.totalorder %s80, %s81
      %p92 = scmp.eq.s32.totalorder %s25, 0
      %p93 = por %p91, %p92
      %p94 = scmp.ne.s32.totalorder %s80, %s81
      %p95 = scmp.eq.s32.totalorder %s26, 1
      %p96 = por %p94, %p95
      %p98 = scmp.ne.s32.totalorder %s81, %s97
      %p99 = scmp.eq.s32.totalorder %s26, 0
      %p100 = por %p98, %p99
      %s101 = ssub.s32 %s20, %s27
      %p102 = scmp.eq.s32.totalorder %s101, 0
      %s104 = sadd.s32 %s103, 1
      %s105 = scalar_select %p102, %s103, %s104
      %p108 = pneg %p102
      %p109 = scmp.eq.s32.totalorder %s20, 1
      %p110 = por %p108, %p109
      %p111 = scmp.ne.s32.totalorder %s103, %s106
      %p112 = scmp.eq.s32.totalorder %s20, 0
      %p113 = por %p111, %p112
      %p114 = scmp.ne.s32.totalorder %s103, %s106
      %p115 = scmp.eq.s32.totalorder %s25, 1
      %p116 = por %p114, %p115
      %p117 = scmp.ne.s32.totalorder %s106, %s107
      %p118 = scmp.eq.s32.totalorder %s25, 0
      %p119 = por %p117, %p118
      %p120 = scmp.ne.s32.totalorder %s106, %s107
      %p121 = scmp.eq.s32.totalorder %s26, 1
      %p122 = por %p120, %p121
      %p124 = scmp.ne.s32.totalorder %s107, %s123
      %p125 = scmp.eq.s32.totalorder %s26, 0
      %p126 = por %p124, %p125
      %s127 = ssub.s32 %s20, %s27
      %p128 = scmp.eq.s32.totalorder %s127, 0
      %s130 = sadd.s32 %s129, 1
      %s131 = scalar_select %p128, %s129, %s130
      %p134 = pneg %p128
      %p135 = scmp.eq.s32.totalorder %s20, 1
      %p136 = por %p134, %p135
      %p137 = scmp.ne.s32.totalorder %s129, %s132
      %p138 = scmp.eq.s32.totalorder %s20, 0
      %p139 = por %p137, %p138
      %p140 = scmp.ne.s32.totalorder %s129, %s132
      %p141 = scmp.eq.s32.totalorder %s25, 1
      %p142 = por %p140, %p141
      %p143 = scmp.ne.s32.totalorder %s132, %s133
      %p144 = scmp.eq.s32.totalorder %s25, 0
      %p145 = por %p143, %p144
      %p146 = scmp.ne.s32.totalorder %s132, %s133
      %p147 = scmp.eq.s32.totalorder %s26, 1
      %p148 = por %p146, %p147
      %p150 = scmp.ne.s32.totalorder %s133, %s149
      %p151 = scmp.eq.s32.totalorder %s26, 0
      %p152 = por %p150, %p151
      %p153 = scmp.le.s32.totalorder 1, %s20
      %p154 = scmp.lt.s32.totalorder %s20, 3
      %p155 = pnand %p153, %p154
      %p156 = pneg %p155
      // Predicated region
      $region9: #{tpu_custom_call.1} parent=5 // pred_check
        _
      $region10: #{tpu_custom_call.1} parent=5 // pred_check_branch
        %158 = sbr.rel (%p155) target = $region12
      $region11: #{tpu_custom_call.1} parent=5 // pred_region
        %s159 = ssub.s32 %s20, 1
        // Predicated region
        $region13: #{tpu_custom_call.1} parent=11 // pred_check
          %p160 = pneg %p41
        $region14: #{tpu_custom_call.1} parent=11 // pred_check_branch
          %162 = sbr.rel (%p160) target = $region16
        $region15: #{tpu_custom_call.1} parent=11 // pred_region
          %164 = vsyncadd [#allocation5], 0
          %s166 = sshll.u32 %s0, 4
          %s167 = int_to_ptr.hbm [resolvable:$true] %s166
          %169 = dma.hbm_to_smem %s167, 16, [#allocation2], [#allocation5]
        $region16: #{tpu_custom_call.1} parent=11 // pred_fallthru
          _
      $region12: #{tpu_custom_call.1} parent=5 // pred_fallthru
        _
      %p170 = scmp.lt.s32.totalorder %s20, 2
      // Predicated region
      $region17: #{tpu_custom_call.1} parent=5 // pred_check
        %p171 = pneg %p170
      $region18: #{tpu_custom_call.1} parent=5 // pred_check_branch
        %173 = sbr.rel (%p171) target = $region20
      $region19: #{tpu_custom_call.1} parent=5 // pred_region
        // Predicated region
        $region21: #{tpu_custom_call.1} parent=19 // pred_check
          %p174 = pneg %p61
        $region22: #{tpu_custom_call.1} parent=19 // pred_check_branch
          %176 = sbr.rel (%p174) target = $region24
        $region23: #{tpu_custom_call.1} parent=19 // pred_region
          %s177 = sand.u32 %s51, 1
          %s178 = scalar_lea.sflag [#allocation3], %s177
          %s179 = sand.u32 %s51, 1
          %s180 = smul.addr %s179, 8
          %s181 = scalar_lea.vmem [#allocation6], %s180
          %183 = vsyncadd %s178, 0
          %s184 = smul.addr %s20, 8
          %s185 = scalar_lea.hbm %s1, %s184
          %s187 = sshll.u32 %s185, 4
          %s188 = int_to_ptr.hbm [resolvable:$true] %s187
          %s189 = sshll.u32 %s181, 4
          %s190 = int_to_ptr.vmem [resolvable:$true] %s189
          %192 = dma.hbm_to_vmem [thread:$0]  %s188, 128, %s190, %s178
        $region24: #{tpu_custom_call.1} parent=19 // pred_fallthru
          _
        // Predicated region
        $region25: #{tpu_custom_call.1} parent=19 // pred_check
          %p193 = pneg %p87
        $region26: #{tpu_custom_call.1} parent=19 // pred_check_branch
          %195 = sbr.rel (%p193) target = $region28
        $region27: #{tpu_custom_call.1} parent=19 // pred_region
          %s196 = sand.u32 %s20, 1
          %s197 = scalar_lea.sflag [#allocation8], %s196
          %s198 = sand.u32 %s77, 1
          %s199 = smul.addr %s198, 8
          %s200 = scalar_lea.vmem [#allocation7], %s199
          %202 = vsyncadd %s197, 0
          %s203 = smul.addr %s20, 8
          %s204 = scalar_lea.hbm %s2, %s203
          %s206 = sshll.u32 %s204, 4
          %s207 = int_to_ptr.hbm [resolvable:$true] %s206
          %s208 = sshll.u32 %s200, 4
          %s209 = int_to_ptr.vmem [resolvable:$true] %s208
          %211 = dma.hbm_to_vmem [thread:$0]  %s207, 128, %s209, %s197
        $region28: #{tpu_custom_call.1} parent=19 // pred_fallthru
          _
        // Predicated region
        $region29: #{tpu_custom_call.1} parent=19 // pred_check
          %p212 = pneg %p113
        $region30: #{tpu_custom_call.1} parent=19 // pred_check_branch
          %214 = sbr.rel (%p212) target = $region32
        $region31: #{tpu_custom_call.1} parent=19 // pred_region
          %s215 = sand.u32 %s20, 1
          %s216 = scalar_lea.sflag [#allocation8], %s215
          %s217 = sand.u32 %s103, 1
          %s218 = smul.addr %s217, 8
          %s219 = scalar_lea.vmem [#allocation9], %s218
          %221 = vsyncadd %s216, 0
          %s222 = smul.addr %s20, 8
          %s223 = scalar_lea.hbm %s3, %s222
          %s225 = sshll.u32 %s223, 4
          %s226 = int_to_ptr.hbm [resolvable:$true] %s225
          %s227 = sshll.u32 %s219, 4
          %s228 = int_to_ptr.vmem [resolvable:$true] %s227
          %230 = dma.hbm_to_vmem [thread:$0]  %s226, 128, %s228, %s216
        $region32: #{tpu_custom_call.1} parent=19 // pred_fallthru
          _
      $region20: #{tpu_custom_call.1} parent=5 // pred_fallthru
        _
      %p231 = scmp.le.s32.totalorder 1, %s20
      %p232 = scmp.lt.s32.totalorder %s20, 3
      %p233 = pnand %p231, %p232
      %p234 = pneg %p233
      // Predicated region
      $region33: #{tpu_custom_call.1} parent=5 // pred_check
        _
      $region34: #{tpu_custom_call.1} parent=5 // pred_check_branch
        %236 = sbr.rel (%p233) target = $region36
      $region35: #{tpu_custom_call.1} parent=5 // pred_region
        %s237 = ssub.s32 %s20, 1
        // Predicated region
        $region37: #{tpu_custom_call.1} parent=35 // pred_check
          %p238 = pneg %p41
        $region38: #{tpu_custom_call.1} parent=35 // pred_check_branch
          %240 = sbr.rel (%p238) target = $region40
        $region39: #{tpu_custom_call.1} parent=35 // pred_region
          %242 = dma.done [#allocation5], 16
        $region40: #{tpu_custom_call.1} parent=35 // pred_fallthru
          _
        %s243 = sand.u32 %s54, 1
        %s244 = scalar_lea.sflag [#allocation3], %s243
        %s245 = sand.u32 %s54, 1
        %s246 = smul.addr %s245, 8
        %s247 = scalar_lea.vmem [#allocation6], %s246
        // Predicated region
        $region41: #{tpu_custom_call.1} parent=35 // pred_check
          %p248 = pneg %p67
        $region42: #{tpu_custom_call.1} parent=35 // pred_check_branch
          %250 = sbr.rel (%p248) target = $region44
        $region43: #{tpu_custom_call.1} parent=35 // pred_region
          %252 = dma.done %s244, 128
        $region44: #{tpu_custom_call.1} parent=35 // pred_fallthru
          _
        %s253 = sand.u32 %s25, 1
        %s254 = scalar_lea.sflag [#allocation8], %s253
        %s255 = sand.u32 %s80, 1
        %s256 = smul.addr %s255, 8
        %s257 = scalar_lea.vmem [#allocation7], %s256
        // Predicated region
        $region45: #{tpu_custom_call.1} parent=35 // pred_check
          %p258 = pneg %p93
        $region46: #{tpu_custom_call.1} parent=35 // pred_check_branch
          %260 = sbr.rel (%p258) target = $region48
        $region47: #{tpu_custom_call.1} parent=35 // pred_region
          %262 = dma.done %s254, 128
        $region48: #{tpu_custom_call.1} parent=35 // pred_fallthru
          _
        %s263 = sand.u32 %s25, 1
        %s264 = scalar_lea.sflag [#allocation8], %s263
        %s265 = sand.u32 %s106, 1
        %s266 = smul.addr %s265, 8
        %s267 = scalar_lea.vmem [#allocation9], %s266
        // Predicated region
        $region49: #{tpu_custom_call.1} parent=35 // pred_check
          %p268 = pneg %p119
        $region50: #{tpu_custom_call.1} parent=35 // pred_check_branch
          %270 = sbr.rel (%p268) target = $region52
        $region51: #{tpu_custom_call.1} parent=35 // pred_region
          %272 = dma.done %s264, 128
        $region52: #{tpu_custom_call.1} parent=35 // pred_fallthru
          _
        %273 = sfence
        %p274 = pneg %p41
        %p275 = pneg %p38
        %s276 = sand.u32 %s54, 1
        %s277 = scalar_lea.sflag [#allocation3], %s276
        %s278 = sand.u32 %s54, 1
        %s279 = smul.addr %s278, 8
        %s280 = scalar_lea.vmem [#allocation6], %s279
        %p281 = pneg %p67
        %p282 = pneg %p64
        %s283 = sand.u32 %s25, 1
        %s284 = scalar_lea.sflag [#allocation8], %s283
        %s285 = sand.u32 %s80, 1
        %s286 = smul.addr %s285, 8
        %s287 = scalar_lea.vmem [#allocation7], %s286
        %p288 = pneg %p93
        %p289 = pneg %p90
        %s290 = sand.u32 %s25, 1
        %s291 = scalar_lea.sflag [#allocation8], %s290
        %s292 = sand.u32 %s106, 1
        %s293 = smul.addr %s292, 8
        %s294 = scalar_lea.vmem [#allocation9], %s293
        %p295 = pneg %p119
        %p296 = pneg %p116
        %p297 = pneg %p145
        %p298 = pneg %p142
        %s299 = sand.u32 %s132, 1
        %s300 = scalar_lea.sflag [#allocation4], %s299
        %s301 = sand.u32 %s132, 1
        %s302 = smul.addr %s301, 8
        %s303 = scalar_lea.vmem [#allocation10], %s302
        %s304 = sld [smem:[#allocation2]]
        %v305 = vld [vmem:[%s247] sm:$0xff]
        %v306 = vstv %s304
        %v307 = vmul.f32 %v306, %v305
        %s308 = sld [smem:[#allocation2 + $0x1]]
        %v309 = vld [vmem:[%s257] sm:$0xff]
        %v310 = vstv %s308
        %v311 = vmul.f32 %v310, %v309
        %v312 = vadd.f32 %v307, %v311
        %s313 = sld [smem:[#allocation2 + $0x2]]
        %v314 = vld [vmem:[%s267] sm:$0xff]
        %v315 = vstv %s313
        %v316 = vmul.f32 %v315, %v314
        %v317 = vadd.f32 %v312, %v316
        %318 = vst [vmem:[%s303] sm:$0xff] %v317
        %s319 = sand.u32 %s132, 1
        %s320 = scalar_lea.sflag [#allocation4], %s319
        %s321 = sand.u32 %s132, 1
        %s322 = smul.addr %s321, 8
        %s323 = scalar_lea.vmem [#allocation10], %s322
        // Predicated region
        $region53: #{tpu_custom_call.1} parent=35 // pred_check
          %p324 = pneg %p142
        $region54: #{tpu_custom_call.1} parent=35 // pred_check_branch
          %326 = sbr.rel (%p324) target = $region56
        $region55: #{tpu_custom_call.1} parent=35 // pred_region
          %328 = vsyncadd %s320, 0
          %s329 = smul.addr %s25, 8
          %s330 = scalar_lea.hbm %s4, %s329
          %s332 = sshll.u32 %s323, 4
          %s333 = int_to_ptr.vmem [resolvable:$true] %s332
          %s334 = sshll.u32 %s330, 4
          %s335 = int_to_ptr.hbm [resolvable:$true] %s334
          %337 = dma.vmem_to_hbm [thread:$0]  %s333, 128, %s335, %s320
        $region56: #{tpu_custom_call.1} parent=35 // pred_fallthru
          _
      $region36: #{tpu_custom_call.1} parent=5 // pred_fallthru
        _
      %p338 = scmp.le.s32.totalorder 2, %s20
      // Predicated region
      $region57: #{tpu_custom_call.1} parent=5 // pred_check
        %p339 = pneg %p338
      $region58: #{tpu_custom_call.1} parent=5 // pred_check_branch
        %341 = sbr.rel (%p339) target = $region60
      $region59: #{tpu_custom_call.1} parent=5 // pred_region
        %s342 = ssub.s32 %s20, 2
        // Predicated region
        $region61: #{tpu_custom_call.1} parent=59 // pred_check
          %p343 = pneg %p148
        $region62: #{tpu_custom_call.1} parent=59 // pred_check_branch
          %345 = sbr.rel (%p343) target = $region64
        $region63: #{tpu_custom_call.1} parent=59 // pred_region
          %s346 = sand.u32 %s133, 1
          %s347 = scalar_lea.sflag [#allocation4], %s346
          %s348 = sand.u32 %s133, 1
          %s349 = smul.addr %s348, 8
          %s350 = scalar_lea.vmem [#allocation10], %s349
          %352 = dma.done %s347, 128
        $region64: #{tpu_custom_call.1} parent=59 // pred_fallthru
          _
      $region60: #{tpu_custom_call.1} parent=5 // pred_fallthru
        _
    $region6: #{tpu_custom_call.1} parent=1 // loop_footer
      %s24 = sadd.s32 1, %s20
    $region7: #{tpu_custom_call.1} parent=1 // loop_footer_branch
      %19 = sbr.rel target = $region3
    $region8: #{tpu_custom_call.1} parent=1 // loop_exit
      _
    %353 = vsyncpa [#allocation3], 1
    %s354 = scalar_lea.sflag [#allocation3], 1
    %355 = vsyncpa %s354, 1
    %356 = vsyncpa [#allocation8], 1
    %s357 = scalar_lea.sflag [#allocation8], 1
    %358 = vsyncpa %s357, 1
    %359 = vsyncpa [#allocation4], 1
    %s360 = scalar_lea.sflag [#allocation4], 1
    %361 = vsyncpa %s360, 1
    %362 = vsyncpa [#allocation5], 1
    %s363 = scalar_lea.sflag [#allocation5], 1
    %364 = vsyncpa %s363, 1

</llo_original>
